<compile_context>
chip_gen: v5e
topology: v5e:2x2
jax: 0.10.0
libtpu: 0.0.40
codegen_flags: <defaults>
</compile_context>

<pallas_src>
import functools

import jax
import jax.numpy as jnp
from jax.experimental import pallas as pl
from jax.experimental.pallas import tpu as pltpu


def _cond_kernel(attr_ref, keep_ref, t_ref, b1_ref, w2_ref, b2_ref, o_ref):
    """Fully fused forward: index dropout -> one-hot matmuls -> SiLU -> Linear2."""
    # torch: attr = attr + 1; attr = attr * mask  (dropped positions -> row 0)
    idx = (attr_ref[...] + 1) * keep_ref[...]          # (B, A) int32, values {0,1,2}

    # Embedding gather + Linear1, folded: three one-hot matmuls against T[v].
    acc = None
    for v in range(3):                                 # static unroll
        pv = (idx == v).astype(t_ref.dtype)            # (B, A) bf16 one-hot, exact
        part = jnp.dot(pv, t_ref[v], preferred_element_type=jnp.float32)  # (B, H) f32
        acc = part if acc is None else acc + part

    h = acc + b1_ref[...]                              # (B, H) f32
    h = h * jax.nn.sigmoid(h)                          # SiLU in f32

    out = jnp.dot(h.astype(w2_ref.dtype), w2_ref[...],
                  preferred_element_type=jnp.float32) + b2_ref[...]
    o_ref[...] = out.astype(o_ref.dtype)


@jax.jit
def _cond_pallas(attr, keep, t, b1, w2, b2):
    B, A = attr.shape
    H = t.shape[-1]
    return pl.pallas_call(
        _cond_kernel,
        out_shape=jax.ShapeDtypeStruct((B, H), jnp.float32),
        grid=(1,),                                      # single step: all VMEM-resident
        in_specs=[
            pl.BlockSpec((B, A), lambda i: (0, 0)),     # attr (int32)
            pl.BlockSpec((B, A), lambda i: (0, 0)),     # keep mask (int32)
            pl.BlockSpec((3, A, H), lambda i: (0, 0, 0)),  # folded table T (bf16)
            pl.BlockSpec((1, H), lambda i: (0, 0)),     # b1 (f32)
            pl.BlockSpec((H, H), lambda i: (0, 0)),     # W2 (bf16)
            pl.BlockSpec((1, H), lambda i: (0, 0)),     # b2 (f32)
        ],
        out_specs=pl.BlockSpec((B, H), lambda i: (0, 0)),
        compiler_params=pltpu.CompilerParams(
            dimension_semantics=("arbitrary",),
        ),
    )(attr, keep, t, b1, w2, b2)


def init_params(key, attr_dim, ch):
    """Raw torch-layout parameters (all f32); linear weights stored (in, out)."""
    embed_dim = ch * 4
    in1 = attr_dim * ch
    k_emb, k_w1, k_b1, k_w2, k_b2 = jax.random.split(key, 5)
    return {
        "emb": jax.random.normal(k_emb, (attr_dim * 3, ch), jnp.float32),
        "w1": jax.random.normal(k_w1, (in1, embed_dim), jnp.float32) * (in1 ** -0.5),
        "b1": jax.random.normal(k_b1, (1, embed_dim), jnp.float32) * 0.02,
        "w2": jax.random.normal(k_w2, (embed_dim, embed_dim), jnp.float32)
        * (embed_dim ** -0.5),
        "b2": jax.random.normal(k_b2, (1, embed_dim), jnp.float32) * 0.02,
    }


def fold_params(params, attr_dim, ch):
    """One-time weight prep: fold emb[0:3] into W1 and cast weights to bf16.

    T[v, j, :] = emb[v, :] @ W1[j*ch:(j+1)*ch, :]  -- exact algebraic identity
    with the one-hot formulation used in the kernel.
    """
    embed_dim = params["w1"].shape[1]
    emb3 = params["emb"][:3]                                   # only reachable rows
    w1r = params["w1"].reshape(attr_dim, ch, embed_dim)
    t = jnp.einsum("vc,ach->vah", emb3, w1r)                   # (3, attr_dim, H), f32
    return {
        "t": t.astype(jnp.bfloat16),
        "b1": params["b1"].astype(jnp.float32),
        "w2": params["w2"].astype(jnp.bfloat16),
        "b2": params["b2"].astype(jnp.float32),
    }


def celeba_conditioning(attr, folded, *, training=True, dropout=0.3, rng=None):
    """attr: (B, attr_dim) int32 with values in {-1, 0, 1}."""
    B, A = attr.shape
    if training and dropout > 0.0:
        if rng is None:
            rng = jax.random.PRNGKey(0)
        u = jax.random.uniform(rng, (B, A), jnp.float32)
        keep = (u > jnp.float32(dropout)).astype(jnp.int32)    # torch: rand > p keeps
    else:
        keep = jnp.ones((B, A), jnp.int32)
    return _cond_pallas(attr.astype(jnp.int32), keep,
                        folded["t"], folded["b1"], folded["w2"], folded["b2"])


def reference_forward(attr, params):
    """Pure-JAX, unfolded f32 path mirroring the torch module (eval mode)."""
    idx = attr + 1
    x = jnp.take(params["emb"], idx, axis=0).reshape(attr.shape[0], -1)
    h = x @ params["w1"] + params["b1"]
    h = h * jax.nn.sigmoid(h)
    return h @ params["w2"] + params["b2"]


if __name__ == "__main__":
    # Spec shapes: attr_dim=40, ch=128 -> embed_dim=512; small batch.
    attr_dim, ch, batch = 40, 128, 8

    root = jax.random.PRNGKey(0)
    k_params, k_attr, k_drop = jax.random.split(root, 3)
    params = init_params(k_params, attr_dim, ch)
    folded = fold_params(params, attr_dim, ch)

    # CelebA-style attributes in {-1, 0, 1}.
    attr = jax.random.randint(k_attr, (batch, attr_dim), -1, 2, dtype=jnp.int32)

    # Training path (index dropout) — smoke test.
    out_train = celeba_conditioning(attr, folded, training=True, dropout=0.3,
                                    rng=k_drop)
    out_train = jax.block_until_ready(out_train)
    assert out_train.shape == (batch, ch * 4), out_train.shape
    assert out_train.dtype == jnp.float32

    # Eval path — deterministic; validate against the unfolded pure-f32 reference.
    out_eval = celeba_conditioning(attr, folded, training=False, dropout=0.3)
    out_eval = jax.block_until_ready(out_eval)
    ref = reference_forward(attr, params)
    err = float(jnp.max(jnp.abs(out_eval - ref)))
    scale = float(jnp.max(jnp.abs(ref))) + 1e-6
    # Tolerance covers the deliberate bf16 weight quantization of T / W2.
    assert err / scale < 5e-2, (err, scale)

    print("KERNEL_OK")
</pallas_src>

<mosaic_0001>
module attributes {stable_mosaic.version = 11 : i64} {
  func.func @_cond_kernel(%arg0: i32, %arg1: memref<8x40xi32, #tpu.memory_space<vmem>>, %arg2: memref<8x40xi32, #tpu.memory_space<vmem>>, %arg3: memref<3x40x512xbf16, #tpu.memory_space<vmem>>, %arg4: memref<1x512xf32, #tpu.memory_space<vmem>>, %arg5: memref<512x512xbf16, #tpu.memory_space<vmem>>, %arg6: memref<1x512xf32, #tpu.memory_space<vmem>>, %arg7: memref<8x512xf32, #tpu.memory_space<vmem>>) attributes {dimension_semantics = [#tpu.dimension_semantics<arbitrary>], iteration_bounds = array<i64: 1>, scalar_prefetch = 0 : i64, scratch_operands = 0 : i64, tpu.core_type = #tpu.core_type<tc>, window_params = [{pipeline_mode = #tpu.pipeline_mode<synchronous>, transform_indices = @transform_0, window_bounds = array<i64: 8, 40>}, {pipeline_mode = #tpu.pipeline_mode<synchronous>, transform_indices = @transform_1, window_bounds = array<i64: 8, 40>}, {pipeline_mode = #tpu.pipeline_mode<synchronous>, transform_indices = @transform_2, window_bounds = array<i64: 3, 40, 512>}, {pipeline_mode = #tpu.pipeline_mode<synchronous>, transform_indices = @transform_3, window_bounds = array<i64: 1, 512>}, {pipeline_mode = #tpu.pipeline_mode<synchronous>, transform_indices = @transform_4, window_bounds = array<i64: 512, 512>}, {pipeline_mode = #tpu.pipeline_mode<synchronous>, transform_indices = @transform_5, window_bounds = array<i64: 1, 512>}, {pipeline_mode = #tpu.pipeline_mode<synchronous>, transform_indices = @transform_6, window_bounds = array<i64: 8, 512>}]} {
    %c0 = arith.constant 0 : index
    %c0_0 = arith.constant 0 : index
    %0 = vector.load %arg1[%c0, %c0_0] : memref<8x40xi32, #tpu.memory_space<vmem>>, vector<8x40xi32>
    %c1_i32 = arith.constant 1 : i32
    %1 = vector.broadcast %c1_i32 : i32 to vector<8x40xi32>
    %2 = arith.addi %0, %1 : vector<8x40xi32>
    %c0_1 = arith.constant 0 : index
    %c0_2 = arith.constant 0 : index
    %3 = vector.load %arg2[%c0_1, %c0_2] : memref<8x40xi32, #tpu.memory_space<vmem>>, vector<8x40xi32>
    %4 = arith.muli %2, %3 : vector<8x40xi32>
    %c0_i32 = arith.constant 0 : i32
    %5 = vector.broadcast %c0_i32 : i32 to vector<8x40xi32>
    %6 = arith.cmpi eq, %4, %5 : vector<8x40xi32>
    %7 = arith.extui %6 : vector<8x40xi1> to vector<8x40xi32>
    %8 = arith.sitofp %7 : vector<8x40xi32> to vector<8x40xf32>
    %9 = arith.truncf %8 : vector<8x40xf32> to vector<8x40xbf16>
    %c0_3 = arith.constant 0 : index
    %c0_4 = arith.constant 0 : index
    %c0_5 = arith.constant 0 : index
    %10 = vector.load %arg3[%c0_3, %c0_4, %c0_5] : memref<3x40x512xbf16, #tpu.memory_space<vmem>>, vector<1x40x512xbf16>
    %11 = vector.shape_cast %10 : vector<1x40x512xbf16> to vector<40x512xbf16>
    %cst = arith.constant dense<0.000000e+00> : vector<8x512xf32>
    %12 = tpu.matmul %9, %11, %cst {dimension_numbers = #tpu.dot_dimension_numbers<[1], [0], [0], [1], [0, 0, 1, 1], [], []>} : vector<8x40xbf16>, vector<40x512xbf16>, vector<8x512xf32> -> vector<8x512xf32>
    %c1_i32_6 = arith.constant 1 : i32
    %13 = vector.broadcast %c1_i32_6 : i32 to vector<8x40xi32>
    %14 = arith.cmpi eq, %4, %13 : vector<8x40xi32>
    %15 = arith.extui %14 : vector<8x40xi1> to vector<8x40xi32>
    %16 = arith.sitofp %15 : vector<8x40xi32> to vector<8x40xf32>
    %17 = arith.truncf %16 : vector<8x40xf32> to vector<8x40xbf16>
    %c1 = arith.constant 1 : index
    %c0_7 = arith.constant 0 : index
    %c0_8 = arith.constant 0 : index
    %18 = vector.load %arg3[%c1, %c0_7, %c0_8] : memref<3x40x512xbf16, #tpu.memory_space<vmem>>, vector<1x40x512xbf16>
    %19 = vector.shape_cast %18 : vector<1x40x512xbf16> to vector<40x512xbf16>
    %cst_9 = arith.constant dense<0.000000e+00> : vector<8x512xf32>
    %20 = tpu.matmul %17, %19, %cst_9 {dimension_numbers = #tpu.dot_dimension_numbers<[1], [0], [0], [1], [0, 0, 1, 1], [], []>} : vector<8x40xbf16>, vector<40x512xbf16>, vector<8x512xf32> -> vector<8x512xf32>
    %21 = arith.addf %12, %20 : vector<8x512xf32>
    %c2_i32 = arith.constant 2 : i32
    %22 = vector.broadcast %c2_i32 : i32 to vector<8x40xi32>
    %23 = arith.cmpi eq, %4, %22 : vector<8x40xi32>
    %24 = arith.extui %23 : vector<8x40xi1> to vector<8x40xi32>
    %25 = arith.sitofp %24 : vector<8x40xi32> to vector<8x40xf32>
    %26 = arith.truncf %25 : vector<8x40xf32> to vector<8x40xbf16>
    %c2 = arith.constant 2 : index
    %c0_10 = arith.constant 0 : index
    %c0_11 = arith.constant 0 : index
    %27 = vector.load %arg3[%c2, %c0_10, %c0_11] : memref<3x40x512xbf16, #tpu.memory_space<vmem>>, vector<1x40x512xbf16>
    %28 = vector.shape_cast %27 : vector<1x40x512xbf16> to vector<40x512xbf16>
    %cst_12 = arith.constant dense<0.000000e+00> : vector<8x512xf32>
    %29 = tpu.matmul %26, %28, %cst_12 {dimension_numbers = #tpu.dot_dimension_numbers<[1], [0], [0], [1], [0, 0, 1, 1], [], []>} : vector<8x40xbf16>, vector<40x512xbf16>, vector<8x512xf32> -> vector<8x512xf32>
    %30 = arith.addf %21, %29 : vector<8x512xf32>
    %c0_13 = arith.constant 0 : index
    %c0_14 = arith.constant 0 : index
    %31 = vector.load %arg4[%c0_13, %c0_14] : memref<1x512xf32, #tpu.memory_space<vmem>>, vector<1x512xf32>
    %32 = vector.broadcast %31 : vector<1x512xf32> to vector<8x512xf32>
    %33 = arith.addf %30, %32 : vector<8x512xf32>
    %34 = arith.negf %33 : vector<8x512xf32>
    %35 = math.exp %34 : vector<8x512xf32>
    %cst_15 = arith.constant 1.000000e+00 : f32
    %36 = vector.broadcast %cst_15 : f32 to vector<8x512xf32>
    %37 = arith.addf %36, %35 : vector<8x512xf32>
    %38 = arith.divf %36, %37 : vector<8x512xf32>
    %39 = arith.mulf %33, %38 : vector<8x512xf32>
    %40 = arith.truncf %39 : vector<8x512xf32> to vector<8x512xbf16>
    %c0_16 = arith.constant 0 : index
    %c0_17 = arith.constant 0 : index
    %41 = vector.load %arg5[%c0_16, %c0_17] : memref<512x512xbf16, #tpu.memory_space<vmem>>, vector<512x512xbf16>
    %cst_18 = arith.constant dense<0.000000e+00> : vector<8x512xf32>
    %42 = tpu.matmul %40, %41, %cst_18 {dimension_numbers = #tpu.dot_dimension_numbers<[1], [0], [0], [1], [0, 0, 1, 1], [], []>} : vector<8x512xbf16>, vector<512x512xbf16>, vector<8x512xf32> -> vector<8x512xf32>
    %c0_19 = arith.constant 0 : index
    %c0_20 = arith.constant 0 : index
    %43 = vector.load %arg6[%c0_19, %c0_20] : memref<1x512xf32, #tpu.memory_space<vmem>>, vector<1x512xf32>
    %44 = vector.broadcast %43 : vector<1x512xf32> to vector<8x512xf32>
    %45 = arith.addf %42, %44 : vector<8x512xf32>
    %c0_21 = arith.constant 0 : index
    %c0_22 = arith.constant 0 : index
    %46 = vector.load %arg7[%c0_21, %c0_22] : memref<8x512xf32, #tpu.memory_space<vmem>>, vector<8x512xf32>
    tpu.vector_store %arg7[%c0_21, %c0_22], %45 {strides = array<i32>} : memref<8x512xf32, #tpu.memory_space<vmem>>, vector<8x512xf32>,
    return
  }
  func.func @transform_0(%arg0: i32) -> (i32, i32) {
    %c0_i32 = arith.constant 0 : i32
    %c0_i32_0 = arith.constant 0 : i32
    %c0_i32_1 = arith.constant 0 : i32
    return %c0_i32, %c0_i32_0 : i32, i32
  }
  func.func @transform_1(%arg0: i32) -> (i32, i32) {
    %c0_i32 = arith.constant 0 : i32
    %c0_i32_0 = arith.constant 0 : i32
    %c0_i32_1 = arith.constant 0 : i32
    return %c0_i32, %c0_i32_0 : i32, i32
  }
  func.func @transform_2(%arg0: i32) -> (i32, i32, i32) {
    %c0_i32 = arith.constant 0 : i32
    %c0_i32_0 = arith.constant 0 : i32
    %c0_i32_1 = arith.constant 0 : i32
    %c0_i32_2 = arith.constant 0 : i32
    return %c0_i32, %c0_i32_0, %c0_i32_1 : i32, i32, i32
  }
  func.func @transform_3(%arg0: i32) -> (i32, i32) {
    %c0_i32 = arith.constant 0 : i32
    %c0_i32_0 = arith.constant 0 : i32
    %c0_i32_1 = arith.constant 0 : i32
    return %c0_i32, %c0_i32_0 : i32, i32
  }
  func.func @transform_4(%arg0: i32) -> (i32, i32) {
    %c0_i32 = arith.constant 0 : i32
    %c0_i32_0 = arith.constant 0 : i32
    %c0_i32_1 = arith.constant 0 : i32
    return %c0_i32, %c0_i32_0 : i32, i32
  }
  func.func @transform_5(%arg0: i32) -> (i32, i32) {
    %c0_i32 = arith.constant 0 : i32
    %c0_i32_0 = arith.constant 0 : i32
    %c0_i32_1 = arith.constant 0 : i32
    return %c0_i32, %c0_i32_0 : i32, i32
  }
  func.func @transform_6(%arg0: i32) -> (i32, i32) {
    %c0_i32 = arith.constant 0 : i32
    %c0_i32_0 = arith.constant 0 : i32
    %c0_i32_1 = arith.constant 0 : i32
    return %c0_i32, %c0_i32_0 : i32, i32
  }
}

</mosaic_0001>

<llo_original>
// kernel: _cond_pallas.1
$region0: #{_cond_pallas.1}
  #allocation0 [shape = 'u32[]', space=smem, size = 0x4, offset = 0x4, fixed_abs, tag = 'smem constant byte address 0x4 - core index']
  #allocation1 [shape = 'u32[72,128]{1,0:T(1,128)}', space=vmem, size = 0x9000, scoped, tag = 'internal scratch']
  %s0 = inlined_call_operand.hbm [shape: s32[8,40], index: 0, kind: input, shape index: {}]
  %s1 = inlined_call_operand.hbm [shape: s32[8,40], index: 1, kind: input, shape index: {}]
  %s2 = inlined_call_operand.hbm [shape: bf16[3,40,512], index: 2, kind: input, shape index: {}]
  %s3 = inlined_call_operand.hbm [shape: f32[1,512], index: 3, kind: input, shape index: {}]
  %s4 = inlined_call_operand.hbm [shape: bf16[512,512], index: 4, kind: input, shape index: {}]
  %s5 = inlined_call_operand.vmem [shape: f32[1,512], index: 5, kind: input, shape index: {}]
  %s6 = inlined_call_operand.hbm [shape: f32[8,512], index: 6, kind: output, shape index: {}]
  %s7 = sld [smem:[#allocation0]]
  $region54: #{_cond_pallas.1} parent=0
    _
  %s9 = ssub.s32 1, %s7
  %s10 = scalar_select 0, %s9, %s7
  $region1: #{_cond_pallas.1} parent=0
    #allocation2 [shape = 'u8[4096]{0}', space=vmem, size = 0x1000, scoped, tag = 'input window, operand 0, single buffered']
    #allocation3 [shape = 's32[1]{0}', space=sflag, size = 0x4, scoped, tag = 'scoped memory for _cond_pallas.1']
    #allocation4 [shape = 's32[1]{0}', space=sflag, size = 0x4, scoped, tag = 'scoped memory for _cond_pallas.1']
    #allocation5 [shape = 'u8[4096]{0}', space=vmem, size = 0x1000, scoped, tag = 'input window, operand 1, single buffered']
    #allocation6 [shape = 's32[1]{0}', space=sflag, size = 0x4, scoped, tag = 'scoped memory for _cond_pallas.1']
    #allocation7 [shape = 'u8[122880]{0}', space=vmem, size = 0x1e000, scoped, tag = 'input window, operand 2, single buffered']
    #allocation8 [shape = 'u8[2048]{0}', space=vmem, size = 0x800, scoped, tag = 'input window, operand 3, single buffered']
    #allocation9 [shape = 's32[1]{0}', space=sflag, size = 0x4, scoped, tag = 'scoped memory for _cond_pallas.1']
    #allocation10 [shape = 'u8[524288]{0}', space=vmem, size = 0x80000, scoped, tag = 'input window, operand 4, single buffered']
    #allocation11 [shape = 'u8[16384]{0}', space=vmem, size = 0x4000, scoped, tag = 'output window, operand 0, single buffered']
    %11 = vsyncpa [#allocation3], 0
    %12 = vsyncpa [#allocation6], 0
    %13 = vsyncpa [#allocation9], 0
    %14 = vsyncpa [#allocation4], 0
    // Predicated region
    $region2: #{_cond_pallas.1} parent=1 // pred_check
      _
    $region3: #{_cond_pallas.1} parent=1 // pred_check_branch
      %16 = sbr.rel (0) target = $region5
    $region4: #{_cond_pallas.1} parent=1 // pred_region
      %18 = vsyncadd [#allocation3], 0
      %s20 = sshll.u32 %s0, 4
      %s21 = int_to_ptr.hbm [resolvable:$true] %s20
      %s22 = sshll.u32 [#allocation2], 4
      %s23 = int_to_ptr.vmem [resolvable:$true] %s22
      %25 = dma.hbm_to_vmem [thread:$0]  %s21, 128, %s23, [#allocation3]
    $region5: #{_cond_pallas.1} parent=1 // pred_fallthru
      _
    // Predicated region
    $region6: #{_cond_pallas.1} parent=1 // pred_check
      _
    $region7: #{_cond_pallas.1} parent=1 // pred_check_branch
      %27 = sbr.rel (0) target = $region9
    $region8: #{_cond_pallas.1} parent=1 // pred_region
      %29 = vsyncadd [#allocation6], 0
      %s31 = sshll.u32 %s1, 4
      %s32 = int_to_ptr.hbm [resolvable:$true] %s31
      %s33 = sshll.u32 [#allocation5], 4
      %s34 = int_to_ptr.vmem [resolvable:$true] %s33
      %36 = dma.hbm_to_vmem [thread:$0]  %s32, 128, %s34, [#allocation6]
    $region9: #{_cond_pallas.1} parent=1 // pred_fallthru
      _
    // Predicated region
    $region10: #{_cond_pallas.1} parent=1 // pred_check
      _
    $region11: #{_cond_pallas.1} parent=1 // pred_check_branch
      %38 = sbr.rel (0) target = $region13
    $region12: #{_cond_pallas.1} parent=1 // pred_region
      %40 = vsyncadd [#allocation6], 0
      %s41 = sshll.u32 %s2, 4
      %s42 = int_to_ptr.hbm [resolvable:$true] %s41
      %s43 = sshll.u32 [#allocation7], 4
      %s44 = int_to_ptr.vmem [resolvable:$true] %s43
      %49 = dma.hbm_to_vmem [thread:$0]  %s42, 3840, %s44, [#allocation6], 256, 256, 16
    $region13: #{_cond_pallas.1} parent=1 // pred_fallthru
      _
    // Predicated region
    $region14: #{_cond_pallas.1} parent=1 // pred_check
      _
    $region15: #{_cond_pallas.1} parent=1 // pred_check_branch
      %51 = sbr.rel (0) target = $region17
    $region16: #{_cond_pallas.1} parent=1 // pred_region
      %53 = vsyncadd [#allocation9], 0
      %s55 = sshll.u32 %s3, 4
      %s56 = int_to_ptr.hbm [resolvable:$true] %s55
      %s57 = sshll.u32 [#allocation8], 4
      %s58 = int_to_ptr.vmem [resolvable:$true] %s57
      %60 = dma.hbm_to_vmem [thread:$0]  %s56, 64, %s58, [#allocation9]
    $region17: #{_cond_pallas.1} parent=1 // pred_fallthru
      _
    // Predicated region
    $region18: #{_cond_pallas.1} parent=1 // pred_check
      _
    $region19: #{_cond_pallas.1} parent=1 // pred_check_branch
      %62 = sbr.rel (0) target = $region21
    $region20: #{_cond_pallas.1} parent=1 // pred_region
      %64 = vsyncadd [#allocation9], 0
      %s65 = sshll.u32 %s4, 4
      %s66 = int_to_ptr.hbm [resolvable:$true] %s65
      %s67 = sshll.u32 [#allocation10], 4
      %s68 = int_to_ptr.vmem [resolvable:$true] %s67
      %73 = dma.hbm_to_vmem [thread:$0]  %s66, 16384, %s68, [#allocation9], 256, 256, 16
    $region21: #{_cond_pallas.1} parent=1 // pred_fallthru
      _
    // Predicated region
    $region22: #{_cond_pallas.1} parent=1 // pred_check
      _
    $region23: #{_cond_pallas.1} parent=1 // pred_check_branch
      %75 = sbr.rel (0) target = $region25
    $region24: #{_cond_pallas.1} parent=1 // pred_region
      _
    $region25: #{_cond_pallas.1} parent=1 // pred_fallthru
      _
    // Predicated region
    $region26: #{_cond_pallas.1} parent=1 // pred_check
      _
    $region27: #{_cond_pallas.1} parent=1 // pred_check_branch
      %77 = sbr.rel (0) target = $region29
    $region28: #{_cond_pallas.1} parent=1 // pred_region
      %79 = dma.done [#allocation3], 128
    $region29: #{_cond_pallas.1} parent=1 // pred_fallthru
      _
    // Predicated region
    $region30: #{_cond_pallas.1} parent=1 // pred_check
      _
    $region31: #{_cond_pallas.1} parent=1 // pred_check_branch
      %81 = sbr.rel (0) target = $region33
    $region32: #{_cond_pallas.1} parent=1 // pred_region
      %83 = dma.done [#allocation6], 128
    $region33: #{_cond_pallas.1} parent=1 // pred_fallthru
      _
    // Predicated region
    $region34: #{_cond_pallas.1} parent=1 // pred_check
      _
    $region35: #{_cond_pallas.1} parent=1 // pred_check_branch
      %85 = sbr.rel (0) target = $region37
    $region36: #{_cond_pallas.1} parent=1 // pred_region
      %87 = dma.done [#allocation6], 3840
    $region37: #{_cond_pallas.1} parent=1 // pred_fallthru
      _
    // Predicated region
    $region38: #{_cond_pallas.1} parent=1 // pred_check
      _
    $region39: #{_cond_pallas.1} parent=1 // pred_check_branch
      %89 = sbr.rel (0) target = $region41
    $region40: #{_cond_pallas.1} parent=1 // pred_region
      %91 = dma.done [#allocation9], 64
    $region41: #{_cond_pallas.1} parent=1 // pred_fallthru
      _
    // Predicated region
    $region42: #{_cond_pallas.1} parent=1 // pred_check
      _
    $region43: #{_cond_pallas.1} parent=1 // pred_check_branch
      %93 = sbr.rel (0) target = $region45
    $region44: #{_cond_pallas.1} parent=1 // pred_region
      %95 = dma.done [#allocation9], 16384
    $region45: #{_cond_pallas.1} parent=1 // pred_fallthru
      _
    %v97 = vld [vmem:[#allocation2] sm:$0xff]
    %v98 = vadd.s32 %v97, 1
    %v99 = vld [vmem:[#allocation5] sm:$0xff]
    %v100 = vmul.u32 %v98, %v99
    %vm101 = vcmp.eq.s32.totalorder %v100, 0
    %v102 = vsel %vm101, 1, 0
    %v103 = vcvt.s32.f32 %v102
    %v104 = vpack.c.bf16 %v103, %v103
    %v105 = vld [vmem:[#allocation7] sm:$0xff]
    %v106 = vld [vmem:[#allocation7 + $0x8] sm:$0xff]
    %v107 = vld [vmem:[#allocation7 + $0x10] sm:$0xff]
    %v108 = vld [vmem:[#allocation7 + $0x18] sm:$0xff]
    %v109 = vld [vmem:[#allocation7 + $0x20] sm:$0xff]
    %v110 = vld [vmem:[#allocation7 + $0x28] sm:$0xff]
    %v111 = vld [vmem:[#allocation7 + $0x30] sm:$0xff]
    %v112 = vld [vmem:[#allocation7 + $0x38] sm:$0xff]
    %v113 = vld [vmem:[#allocation7 + $0x40] sm:$0xff]
    %v114 = vld [vmem:[#allocation7 + $0x48] sm:$0xff]
    %vm115 = vcmp.eq.s32.totalorder %v100, 1
    %v116 = vsel %vm115, 1, 0
    %v117 = vcvt.s32.f32 %v116
    %v118 = vpack.c.bf16 %v117, %v117
    %s119 = scalar_lea.vmem [#allocation7], 80
    %v120 = vld [vmem:[%s119] sm:$0xff]
    %v121 = vld [vmem:[%s119 + $0x8] sm:$0xff]
    %v122 = vld [vmem:[%s119 + $0x10] sm:$0xff]
    %v123 = vld [vmem:[%s119 + $0x18] sm:$0xff]
    %v124 = vld [vmem:[%s119 + $0x20] sm:$0xff]
    %v125 = vld [vmem:[%s119 + $0x28] sm:$0xff]
    %v126 = vld [vmem:[%s119 + $0x30] sm:$0xff]
    %v127 = vld [vmem:[%s119 + $0x38] sm:$0xff]
    %v128 = vld [vmem:[%s119 + $0x40] sm:$0xff]
    %v129 = vld [vmem:[%s119 + $0x48] sm:$0xff]
    %v140 = vunpack.c.l.b16 %v120
    %v141 = vunpack.c.h.b16 %v120
    %v142 = vunpack.c.l.b16 %v121
    %v143 = vunpack.c.h.b16 %v121
    %v144 = vunpack.c.l.b16 %v122
    %v145 = vunpack.c.h.b16 %v122
    %v146 = vunpack.c.l.b16 %v123
    %v147 = vunpack.c.h.b16 %v123
    %v148 = vunpack.c.l.b16 %v124
    %v149 = vunpack.c.h.b16 %v124
    %v150 = vunpack.c.l.b16 %v125
    %v151 = vunpack.c.h.b16 %v125
    %v152 = vunpack.c.l.b16 %v126
    %v153 = vunpack.c.h.b16 %v126
    %v154 = vunpack.c.l.b16 %v127
    %v155 = vunpack.c.h.b16 %v127
    %v156 = vunpack.c.l.b16 %v128
    %v157 = vunpack.c.h.b16 %v128
    %v158 = vunpack.c.l.b16 %v129
    %v159 = vunpack.c.h.b16 %v129
    %v160 = vpack.c.b16 %v144, %v140
    %v161 = vpack.c.b16 %v145, %v141
    %v162 = vpack.c.b16 %v146, %v142
    %v163 = vpack.c.b16 %v147, %v143
    %v164 = vpack.c.b16 %v152, %v148
    %v165 = vpack.c.b16 %v153, %v149
    %v166 = vpack.c.b16 %v154, %v150
    %v167 = vpack.c.b16 %v155, %v151
    %v168 = vpack.c.b16 %v156, %v156
    %v169 = vpack.c.b16 %v157, %v157
    %v170 = vpack.c.b16 %v158, %v158
    %v171 = vpack.c.b16 %v159, %v159
    %vm180 = vcmask 326656
    %v182 = vsel %vm180, %v118, 0
    %vm184 = vcmask 1043456
    %v186 = vsel %vm184, %v168, 0
    %v189 = vsel %vm184, %v169, 0
    %v192 = vsel %vm184, %v170, 0
    %v195 = vsel %vm184, %v171, 0
    %197 = vmatpush.bf16.msra.mxu0 0
    %198 = vmatpush.bf16.msra.mxu0 0
    %199 = vmatpush.bf16.msra.mxu0 0
    %200 = vmatpush.bf16.msra.mxu0 0
    %201 = vmatpush.bf16.msra.mxu0 0
    %202 = vmatpush.bf16.msra.mxu0 %v186
    %203 = vmatpush.bf16.msra.mxu0 %v164
    %204 = vmatpush.bf16.msra.mxu0 %v160
    %205 = vmatmul.bf16.gmra.mxu0 %v182
    %v206 = vpop.f32.mrf.mxu0
    %v207 = vadd.f32 0.0, %v206
    %v208 = vpop.f32.mrf.mxu0
    %209 = vdwg.mxu0
    %210 = vmatpush.bf16.msra.mxu0 0
    %211 = vmatpush.bf16.msra.mxu0 0
    %212 = vmatpush.bf16.msra.mxu0 0
    %213 = vmatpush.bf16.msra.mxu0 0
    %214 = vmatpush.bf16.msra.mxu0 0
    %215 = vmatpush.bf16.msra.mxu0 %v189
    %216 = vmatpush.bf16.msra.mxu0 %v165
    %217 = vmatpush.bf16.msra.mxu0 %v161
    %218 = vmatmul.bf16.gmra.mxu0 %v182
    %v219 = vpop.f32.mrf.mxu0
    %v220 = vadd.f32 0.0, %v219
    %v221 = vpop.f32.mrf.mxu0
    %222 = vdwg.mxu0
    %223 = vmatpush.bf16.msra.mxu0 0
    %224 = vmatpush.bf16.msra.mxu0 0
    %225 = vmatpush.bf16.msra.mxu0 0
    %226 = vmatpush.bf16.msra.mxu0 0
    %227 = vmatpush.bf16.msra.mxu0 0
    %228 = vmatpush.bf16.msra.mxu0 %v192
    %229 = vmatpush.bf16.msra.mxu0 %v166
    %230 = vmatpush.bf16.msra.mxu0 %v162
    %231 = vmatmul.bf16.gmra.mxu0 %v182
    %v232 = vpop.f32.mrf.mxu0
    %v233 = vadd.f32 0.0, %v232
    %v234 = vpop.f32.mrf.mxu0
    %235 = vdwg.mxu0
    %236 = vmatpush.bf16.msra.mxu0 0
    %237 = vmatpush.bf16.msra.mxu0 0
    %238 = vmatpush.bf16.msra.mxu0 0
    %239 = vmatpush.bf16.msra.mxu0 0
    %240 = vmatpush.bf16.msra.mxu0 0
    %241 = vmatpush.bf16.msra.mxu0 %v195
    %242 = vmatpush.bf16.msra.mxu0 %v167
    %243 = vmatpush.bf16.msra.mxu0 %v163
    %244 = vmatmul.bf16.gmra.mxu0 %v182
    %v245 = vpop.f32.mrf.mxu0
    %v246 = vadd.f32 0.0, %v245
    %v247 = vpop.f32.mrf.mxu0
    %248 = vdwg.mxu0
    %v259 = vunpack.c.l.b16 %v105
    %v260 = vunpack.c.h.b16 %v105
    %v261 = vunpack.c.l.b16 %v106
    %v262 = vunpack.c.h.b16 %v106
    %v263 = vunpack.c.l.b16 %v107
    %v264 = vunpack.c.h.b16 %v107
    %v265 = vunpack.c.l.b16 %v108
    %v266 = vunpack.c.h.b16 %v108
    %v267 = vunpack.c.l.b16 %v109
    %v268 = vunpack.c.h.b16 %v109
    %v269 = vunpack.c.l.b16 %v110
    %v270 = vunpack.c.h.b16 %v110
    %v271 = vunpack.c.l.b16 %v111
    %v272 = vunpack.c.h.b16 %v111
    %v273 = vunpack.c.l.b16 %v112
    %v274 = vunpack.c.h.b16 %v112
    %v275 = vunpack.c.l.b16 %v113
    %v276 = vunpack.c.h.b16 %v113
    %v277 = vunpack.c.l.b16 %v114
    %v278 = vunpack.c.h.b16 %v114
    %v279 = vpack.c.b16 %v263, %v259
    %v280 = vpack.c.b16 %v264, %v260
    %v281 = vpack.c.b16 %v265, %v261
    %v282 = vpack.c.b16 %v266, %v262
    %v283 = vpack.c.b16 %v271, %v267
    %v284 = vpack.c.b16 %v272, %v268
    %v285 = vpack.c.b16 %v273, %v269
    %v286 = vpack.c.b16 %v274, %v270
    %v287 = vpack.c.b16 %v275, %v275
    %v288 = vpack.c.b16 %v276, %v276
    %v289 = vpack.c.b16 %v277, %v277
    %v290 = vpack.c.b16 %v278, %v278
    %v300 = vsel %vm180, %v104, 0
    %v303 = vsel %vm184, %v287, 0
    %v306 = vsel %vm184, %v288, 0
    %v309 = vsel %vm184, %v289, 0
    %v312 = vsel %vm184, %v290, 0
    %314 = vmatpush.bf16.msra.mxu0 0
    %315 = vmatpush.bf16.msra.mxu0 0
    %316 = vmatpush.bf16.msra.mxu0 0
    %317 = vmatpush.bf16.msra.mxu0 0
    %318 = vmatpush.bf16.msra.mxu0 0
    %319 = vmatpush.bf16.msra.mxu0 %v303
    %320 = vmatpush.bf16.msra.mxu0 %v283
    %321 = vmatpush.bf16.msra.mxu0 %v279
    %322 = vmatmul.bf16.gmra.mxu0 %v300
    %v323 = vpop.f32.mrf.mxu0
    %v324 = vadd.f32 %v207, %v323
    %v325 = vpop.f32.mrf.mxu0
    %326 = vdwg.mxu0
    %327 = vmatpush.bf16.msra.mxu0 0
    %328 = vmatpush.bf16.msra.mxu0 0
    %329 = vmatpush.bf16.msra.mxu0 0
    %330 = vmatpush.bf16.msra.mxu0 0
    %331 = vmatpush.bf16.msra.mxu0 0
    %332 = vmatpush.bf16.msra.mxu0 %v306
    %333 = vmatpush.bf16.msra.mxu0 %v284
    %334 = vmatpush.bf16.msra.mxu0 %v280
    %335 = vmatmul.bf16.gmra.mxu0 %v300
    %v336 = vpop.f32.mrf.mxu0
    %v337 = vadd.f32 %v220, %v336
    %v338 = vpop.f32.mrf.mxu0
    %339 = vdwg.mxu0
    %340 = vmatpush.bf16.msra.mxu0 0
    %341 = vmatpush.bf16.msra.mxu0 0
    %342 = vmatpush.bf16.msra.mxu0 0
    %343 = vmatpush.bf16.msra.mxu0 0
    %344 = vmatpush.bf16.msra.mxu0 0
    %345 = vmatpush.bf16.msra.mxu0 %v309
    %346 = vmatpush.bf16.msra.mxu0 %v285
    %347 = vmatpush.bf16.msra.mxu0 %v281
    %348 = vmatmul.bf16.gmra.mxu0 %v300
    %v349 = vpop.f32.mrf.mxu0
    %v350 = vadd.f32 %v233, %v349
    %v351 = vpop.f32.mrf.mxu0
    %352 = vdwg.mxu0
    %353 = vmatpush.bf16.msra.mxu0 0
    %354 = vmatpush.bf16.msra.mxu0 0
    %355 = vmatpush.bf16.msra.mxu0 0
    %356 = vmatpush.bf16.msra.mxu0 0
    %357 = vmatpush.bf16.msra.mxu0 0
    %358 = vmatpush.bf16.msra.mxu0 %v312
    %359 = vmatpush.bf16.msra.mxu0 %v286
    %360 = vmatpush.bf16.msra.mxu0 %v282
    %361 = vmatmul.bf16.gmra.mxu0 %v300
    %v362 = vpop.f32.mrf.mxu0
    %v363 = vadd.f32 %v246, %v362
    %v364 = vpop.f32.mrf.mxu0
    %365 = vdwg.mxu0
    %vm366 = vcmp.eq.s32.totalorder %v100, 2
    %v367 = vsel %vm366, 1, 0
    %v368 = vcvt.s32.f32 %v367
    %v369 = vpack.c.bf16 %v368, %v368
    %s370 = scalar_lea.vmem [#allocation7], 160
    %v371 = vld [vmem:[%s370] sm:$0xff]
    %v372 = vld [vmem:[%s370 + $0x8] sm:$0xff]
    %v373 = vld [vmem:[%s370 + $0x10] sm:$0xff]
    %v374 = vld [vmem:[%s370 + $0x18] sm:$0xff]
    %v375 = vld [vmem:[%s370 + $0x20] sm:$0xff]
    %v376 = vld [vmem:[%s370 + $0x28] sm:$0xff]
    %v377 = vld [vmem:[%s370 + $0x30] sm:$0xff]
    %v378 = vld [vmem:[%s370 + $0x38] sm:$0xff]
    %v379 = vld [vmem:[%s370 + $0x40] sm:$0xff]
    %v380 = vld [vmem:[%s370 + $0x48] sm:$0xff]
    %v391 = vunpack.c.l.b16 %v371
    %v392 = vunpack.c.h.b16 %v371
    %v393 = vunpack.c.l.b16 %v372
    %v394 = vunpack.c.h.b16 %v372
    %v395 = vunpack.c.l.b16 %v373
    %v396 = vunpack.c.h.b16 %v373
    %v397 = vunpack.c.l.b16 %v374
    %v398 = vunpack.c.h.b16 %v374
    %v399 = vunpack.c.l.b16 %v375
    %v400 = vunpack.c.h.b16 %v375
    %v401 = vunpack.c.l.b16 %v376
    %v402 = vunpack.c.h.b16 %v376
    %v403 = vunpack.c.l.b16 %v377
    %v404 = vunpack.c.h.b16 %v377
    %v405 = vunpack.c.l.b16 %v378
    %v406 = vunpack.c.h.b16 %v378
    %v407 = vunpack.c.l.b16 %v379
    %v408 = vunpack.c.h.b16 %v379
    %v409 = vunpack.c.l.b16 %v380
    %v410 = vunpack.c.h.b16 %v380
    %v411 = vpack.c.b16 %v395, %v391
    %v412 = vpack.c.b16 %v396, %v392
    %v413 = vpack.c.b16 %v397, %v393
    %v414 = vpack.c.b16 %v398, %v394
    %v415 = vpack.c.b16 %v403, %v399
    %v416 = vpack.c.b16 %v404, %v400
    %v417 = vpack.c.b16 %v405, %v401
    %v418 = vpack.c.b16 %v406, %v402
    %v419 = vpack.c.b16 %v407, %v407
    %v420 = vpack.c.b16 %v408, %v408
    %v421 = vpack.c.b16 %v409, %v409
    %v422 = vpack.c.b16 %v410, %v410
    %v432 = vsel %vm180, %v369, 0
    %v435 = vsel %vm184, %v419, 0
    %v438 = vsel %vm184, %v420, 0
    %v441 = vsel %vm184, %v421, 0
    %v444 = vsel %vm184, %v422, 0
    %446 = vmatpush.bf16.msra.mxu0 0
    %447 = vmatpush.bf16.msra.mxu0 0
    %448 = vmatpush.bf16.msra.mxu0 0
    %449 = vmatpush.bf16.msra.mxu0 0
    %450 = vmatpush.bf16.msra.mxu0 0
    %451 = vmatpush.bf16.msra.mxu0 %v435
    %452 = vmatpush.bf16.msra.mxu0 %v415
    %453 = vmatpush.bf16.msra.mxu0 %v411
    %454 = vmatmul.bf16.gmra.mxu0 %v432
    %v455 = vpop.f32.mrf.mxu0
    %v456 = vadd.f32 0.0, %v455
    %v457 = vpop.f32.mrf.mxu0
    %458 = vdwg.mxu0
    %459 = vmatpush.bf16.msra.mxu0 0
    %460 = vmatpush.bf16.msra.mxu0 0
    %461 = vmatpush.bf16.msra.mxu0 0
    %462 = vmatpush.bf16.msra.mxu0 0
    %463 = vmatpush.bf16.msra.mxu0 0
    %464 = vmatpush.bf16.msra.mxu0 %v438
    %465 = vmatpush.bf16.msra.mxu0 %v416
    %466 = vmatpush.bf16.msra.mxu0 %v412
    %467 = vmatmul.bf16.gmra.mxu0 %v432
    %v468 = vpop.f32.mrf.mxu0
    %v469 = vadd.f32 0.0, %v468
    %v470 = vpop.f32.mrf.mxu0
    %471 = vdwg.mxu0
    %472 = vmatpush.bf16.msra.mxu0 0
    %473 = vmatpush.bf16.msra.mxu0 0
    %474 = vmatpush.bf16.msra.mxu0 0
    %475 = vmatpush.bf16.msra.mxu0 0
    %476 = vmatpush.bf16.msra.mxu0 0
    %477 = vmatpush.bf16.msra.mxu0 %v441
    %478 = vmatpush.bf16.msra.mxu0 %v417
    %479 = vmatpush.bf16.msra.mxu0 %v413
    %480 = vmatmul.bf16.gmra.mxu0 %v432
    %v481 = vpop.f32.mrf.mxu0
    %v482 = vadd.f32 0.0, %v481
    %v483 = vpop.f32.mrf.mxu0
    %484 = vdwg.mxu0
    %485 = vmatpush.bf16.msra.mxu0 0
    %486 = vmatpush.bf16.msra.mxu0 0
    %487 = vmatpush.bf16.msra.mxu0 0
    %488 = vmatpush.bf16.msra.mxu0 0
    %489 = vmatpush.bf16.msra.mxu0 0
    %490 = vmatpush.bf16.msra.mxu0 %v444
    %491 = vmatpush.bf16.msra.mxu0 %v418
    %492 = vmatpush.bf16.msra.mxu0 %v414
    %493 = vmatmul.bf16.gmra.mxu0 %v432
    %v494 = vpop.f32.mrf.mxu0
    %v495 = vadd.f32 0.0, %v494
    %v496 = vpop.f32.mrf.mxu0
    %497 = vdwg.mxu0
    %v498 = vadd.f32 %v324, %v456
    %v499 = vadd.f32 %v337, %v469
    %v500 = vadd.f32 %v350, %v482
    %v501 = vadd.f32 %v363, %v495
    %v502 = vld [vmem:[#allocation8] sm:$0xf]
    %v504 = vperm.slane %v502, 0
    %v505 = vperm.slane %v502, 1
    %v506 = vperm.slane %v502, 2
    %v507 = vperm.slane %v502, 3
    %v512 = vadd.f32 %v498, %v504
    %v513 = vadd.f32 %v499, %v505
    %v514 = vadd.f32 %v500, %v506
    %v515 = vadd.f32 %v501, %v507
    %v516 = vxor.u32 %v512, 2147483648
    %v517 = vxor.u32 %v513, 2147483648
    %v518 = vxor.u32 %v514, 2147483648
    %v519 = vxor.u32 %v515, 2147483648
    %v520 = vmul.f32 %v516, 1.442695
    %v521 = vpow.pop %v520
    %v522 = vmul.f32 %v517, 1.442695
    %v523 = vpow.pop %v522
    %v524 = vmul.f32 %v518, 1.442695
    %v525 = vpow.pop %v524
    %v526 = vmul.f32 %v519, 1.442695
    %v527 = vpow.pop %v526
    %v528 = vadd.f32 %v521, 1.0
    %v529 = vadd.f32 %v523, 1.0
    %v530 = vadd.f32 %v525, 1.0
    %v531 = vadd.f32 %v527, 1.0
    %v532 = vrcp.pop %v528
    %v533 = vmul.f32 %v528, %v532
    %v534 = vsub.f32 1.0, %v533
    %v535 = vmul.f32 %v532, %v534
    %v536 = vadd.f32 %v532, %v535
    %vm537 = vweird.f32 %v528
    %vm538 = vweird.f32 %v532
    %vm539 = vmor %vm537, %vm538
    %v540 = vsel %vm539, %v532, %v536
    %v541 = vand.u32 2147483647, %v528
    %vm542 = vcmp.eq.f32.partialorder %v541, 8.507059e+37
    %v543 = vand.u32 %v528, 2147483648
    %v544 = vor.u32 1.1754944e-38, %v543
    %v545 = vsel %vm542, %v544, %v540
    %v546 = vmul.f32 1.0, %v545
    %v547 = vrcp.pop %v529
    %v548 = vmul.f32 %v529, %v547
    %v549 = vsub.f32 1.0, %v548
    %v550 = vmul.f32 %v547, %v549
    %v551 = vadd.f32 %v547, %v550
    %vm552 = vweird.f32 %v529
    %vm553 = vweird.f32 %v547
    %vm554 = vmor %vm552, %vm553
    %v555 = vsel %vm554, %v547, %v551
    %v556 = vand.u32 2147483647, %v529
    %vm557 = vcmp.eq.f32.partialorder %v556, 8.507059e+37
    %v558 = vand.u32 %v529, 2147483648
    %v559 = vor.u32 1.1754944e-38, %v558
    %v560 = vsel %vm557, %v559, %v555
    %v561 = vmul.f32 1.0, %v560
    %v562 = vrcp.pop %v530
    %v563 = vmul.f32 %v530, %v562
    %v564 = vsub.f32 1.0, %v563
    %v565 = vmul.f32 %v562, %v564
    %v566 = vadd.f32 %v562, %v565
    %vm567 = vweird.f32 %v530
    %vm568 = vweird.f32 %v562
    %vm569 = vmor %vm567, %vm568
    %v570 = vsel %vm569, %v562, %v566
    %v571 = vand.u32 2147483647, %v530
    %vm572 = vcmp.eq.f32.partialorder %v571, 8.507059e+37
    %v573 = vand.u32 %v530, 2147483648
    %v574 = vor.u32 1.1754944e-38, %v573
    %v575 = vsel %vm572, %v574, %v570
    %v576 = vmul.f32 1.0, %v575
    %v577 = vrcp.pop %v531
    %v578 = vmul.f32 %v531, %v577
    %v579 = vsub.f32 1.0, %v578
    %v580 = vmul.f32 %v577, %v579
    %v581 = vadd.f32 %v577, %v580
    %vm582 = vweird.f32 %v531
    %vm583 = vweird.f32 %v577
    %vm584 = vmor %vm582, %vm583
    %v585 = vsel %vm584, %v577, %v581
    %v586 = vand.u32 2147483647, %v531
    %vm587 = vcmp.eq.f32.partialorder %v586, 8.507059e+37
    %v588 = vand.u32 %v531, 2147483648
    %v589 = vor.u32 1.1754944e-38, %v588
    %v590 = vsel %vm587, %v589, %v585
    %v591 = vmul.f32 1.0, %v590
    %v592 = vmul.f32 %v512, %v546
    %v593 = vmul.f32 %v513, %v561
    %v594 = vmul.f32 %v514, %v576
    %v595 = vmul.f32 %v515, %v591
    %v596 = vpack.c.bf16 %v592, %v592
    %v597 = vpack.c.bf16 %v593, %v593
    %v598 = vpack.c.bf16 %v594, %v594
    %v599 = vpack.c.bf16 %v595, %v595
    %v600 = vld [vmem:[#allocation10] sm:$0xff]
    %v601 = vld [vmem:[#allocation10 + $0x8] sm:$0xff]
    %v602 = vld [vmem:[#allocation10 + $0x10] sm:$0xff]
    %v603 = vld [vmem:[#allocation10 + $0x18] sm:$0xff]
    %v604 = vld [vmem:[#allocation10 + $0x20] sm:$0xff]
    %v605 = vld [vmem:[#allocation10 + $0x28] sm:$0xff]
    %v606 = vld [vmem:[#allocation10 + $0x30] sm:$0xff]
    %v607 = vld [vmem:[#allocation10 + $0x38] sm:$0xff]
    %v608 = vld [vmem:[#allocation10 + $0x40] sm:$0xff]
    %v609 = vld [vmem:[#allocation10 + $0x48] sm:$0xff]
    %v610 = vld [vmem:[#allocation10 + $0x50] sm:$0xff]
    %v611 = vld [vmem:[#allocation10 + $0x58] sm:$0xff]
    %v612 = vld [vmem:[#allocation10 + $0x60] sm:$0xff]
    %v613 = vld [vmem:[#allocation10 + $0x68] sm:$0xff]
    %v614 = vld [vmem:[#allocation10 + $0x70] sm:$0xff]
    %v615 = vld [vmem:[#allocation10 + $0x78] sm:$0xff]
    %v616 = vld [vmem:[#allocation10 + $0x80] sm:$0xff]
    %v617 = vld [vmem:[#allocation10 + $0x88] sm:$0xff]
    %v618 = vld [vmem:[#allocation10 + $0x90] sm:$0xff]
    %v619 = vld [vmem:[#allocation10 + $0x98] sm:$0xff]
    %v620 = vld [vmem:[#allocation10 + $0xa0] sm:$0xff]
    %v621 = vld [vmem:[#allocation10 + $0xa8] sm:$0xff]
    %v622 = vld [vmem:[#allocation10 + $0xb0] sm:$0xff]
    %v623 = vld [vmem:[#allocation10 + $0xb8] sm:$0xff]
    %v624 = vld [vmem:[#allocation10 + $0xc0] sm:$0xff]
    %v625 = vld [vmem:[#allocation10 + $0xc8] sm:$0xff]
    %v626 = vld [vmem:[#allocation10 + $0xd0] sm:$0xff]
    %v627 = vld [vmem:[#allocation10 + $0xd8] sm:$0xff]
    %v628 = vld [vmem:[#allocation10 + $0xe0] sm:$0xff]
    %v629 = vld [vmem:[#allocation10 + $0xe8] sm:$0xff]
    %v630 = vld [vmem:[#allocation10 + $0xf0] sm:$0xff]
    %v631 = vld [vmem:[#allocation10 + $0xf8] sm:$0xff]
    %v632 = vld [vmem:[#allocation10 + $0x100] sm:$0xff]
    %v633 = vld [vmem:[#allocation10 + $0x108] sm:$0xff]
    %v634 = vld [vmem:[#allocation10 + $0x110] sm:$0xff]
    %v635 = vld [vmem:[#allocation10 + $0x118] sm:$0xff]
    %v636 = vld [vmem:[#allocation10 + $0x120] sm:$0xff]
    %v637 = vld [vmem:[#allocation10 + $0x128] sm:$0xff]
    %v638 = vld [vmem:[#allocation10 + $0x130] sm:$0xff]
    %v639 = vld [vmem:[#allocation10 + $0x138] sm:$0xff]
    %v640 = vld [vmem:[#allocation10 + $0x140] sm:$0xff]
    %v641 = vld [vmem:[#allocation10 + $0x148] sm:$0xff]
    %v642 = vld [vmem:[#allocation10 + $0x150] sm:$0xff]
    %v643 = vld [vmem:[#allocation10 + $0x158] sm:$0xff]
    %v644 = vld [vmem:[#allocation10 + $0x160] sm:$0xff]
    %v645 = vld [vmem:[#allocation10 + $0x168] sm:$0xff]
    %v646 = vld [vmem:[#allocation10 + $0x170] sm:$0xff]
    %v647 = vld [vmem:[#allocation10 + $0x178] sm:$0xff]
    %v648 = vld [vmem:[#allocation10 + $0x180] sm:$0xff]
    %v649 = vld [vmem:[#allocation10 + $0x188] sm:$0xff]
    %v650 = vld [vmem:[#allocation10 + $0x190] sm:$0xff]
    %v651 = vld [vmem:[#allocation10 + $0x198] sm:$0xff]
    %v652 = vld [vmem:[#allocation10 + $0x1a0] sm:$0xff]
    %v653 = vld [vmem:[#allocation10 + $0x1a8] sm:$0xff]
    %v654 = vld [vmem:[#allocation10 + $0x1b0] sm:$0xff]
    %v655 = vld [vmem:[#allocation10 + $0x1b8] sm:$0xff]
    %v656 = vld [vmem:[#allocation10 + $0x1c0] sm:$0xff]
    %v657 = vld [vmem:[#allocation10 + $0x1c8] sm:$0xff]
    %v658 = vld [vmem:[#allocation10 + $0x1d0] sm:$0xff]
    %v659 = vld [vmem:[#allocation10 + $0x1d8] sm:$0xff]
    %v660 = vld [vmem:[#allocation10 + $0x1e0] sm:$0xff]
    %v661 = vld [vmem:[#allocation10 + $0x1e8] sm:$0xff]
    %v662 = vld [vmem:[#allocation10 + $0x1f0] sm:$0xff]
    %v663 = vld [vmem:[#allocation10 + $0x1f8] sm:$0xff]
    %v664 = vld [vmem:[#allocation10 + $0x200] sm:$0xff]
    %v665 = vld [vmem:[#allocation10 + $0x208] sm:$0xff]
    %v666 = vld [vmem:[#allocation10 + $0x210] sm:$0xff]
    %v667 = vld [vmem:[#allocation10 + $0x218] sm:$0xff]
    %v668 = vld [vmem:[#allocation10 + $0x220] sm:$0xff]
    %v669 = vld [vmem:[#allocation10 + $0x228] sm:$0xff]
    %v670 = vld [vmem:[#allocation10 + $0x230] sm:$0xff]
    %v671 = vld [vmem:[#allocation10 + $0x238] sm:$0xff]
    %v672 = vld [vmem:[#allocation10 + $0x240] sm:$0xff]
    %v673 = vld [vmem:[#allocation10 + $0x248] sm:$0xff]
    %v674 = vld [vmem:[#allocation10 + $0x250] sm:$0xff]
    %v675 = vld [vmem:[#allocation10 + $0x258] sm:$0xff]
    %v676 = vld [vmem:[#allocation10 + $0x260] sm:$0xff]
    %v677 = vld [vmem:[#allocation10 + $0x268] sm:$0xff]
    %v678 = vld [vmem:[#allocation10 + $0x270] sm:$0xff]
    %v679 = vld [vmem:[#allocation10 + $0x278] sm:$0xff]
    %v680 = vld [vmem:[#allocation10 + $0x280] sm:$0xff]
    %v681 = vld [vmem:[#allocation10 + $0x288] sm:$0xff]
    %v682 = vld [vmem:[#allocation10 + $0x290] sm:$0xff]
    %v683 = vld [vmem:[#allocation10 + $0x298] sm:$0xff]
    %v684 = vld [vmem:[#allocation10 + $0x2a0] sm:$0xff]
    %v685 = vld [vmem:[#allocation10 + $0x2a8] sm:$0xff]
    %v686 = vld [vmem:[#allocation10 + $0x2b0] sm:$0xff]
    %v687 = vld [vmem:[#allocation10 + $0x2b8] sm:$0xff]
    %v688 = vld [vmem:[#allocation10 + $0x2c0] sm:$0xff]
    %v689 = vld [vmem:[#allocation10 + $0x2c8] sm:$0xff]
    %v690 = vld [vmem:[#allocation10 + $0x2d0] sm:$0xff]
    %v691 = vld [vmem:[#allocation10 + $0x2d8] sm:$0xff]
    %v692 = vld [vmem:[#allocation10 + $0x2e0] sm:$0xff]
    %v693 = vld [vmem:[#allocation10 + $0x2e8] sm:$0xff]
    %v694 = vld [vmem:[#allocation10 + $0x2f0] sm:$0xff]
    %v695 = vld [vmem:[#allocation10 + $0x2f8] sm:$0xff]
    %v696 = vld [vmem:[#allocation10 + $0x300] sm:$0xff]
    %v697 = vld [vmem:[#allocation10 + $0x308] sm:$0xff]
    %v698 = vld [vmem:[#allocation10 + $0x310] sm:$0xff]
    %v699 = vld [vmem:[#allocation10 + $0x318] sm:$0xff]
    %v700 = vld [vmem:[#allocation10 + $0x320] sm:$0xff]
    %v701 = vld [vmem:[#allocation10 + $0x328] sm:$0xff]
    %v702 = vld [vmem:[#allocation10 + $0x330] sm:$0xff]
    %v703 = vld [vmem:[#allocation10 + $0x338] sm:$0xff]
    %v704 = vld [vmem:[#allocation10 + $0x340] sm:$0xff]
    %v705 = vld [vmem:[#allocation10 + $0x348] sm:$0xff]
    %v706 = vld [vmem:[#allocation10 + $0x350] sm:$0xff]
    %v707 = vld [vmem:[#allocation10 + $0x358] sm:$0xff]
    %v708 = vld [vmem:[#allocation10 + $0x360] sm:$0xff]
    %v709 = vld [vmem:[#allocation10 + $0x368] sm:$0xff]
    %v710 = vld [vmem:[#allocation10 + $0x370] sm:$0xff]
    %v711 = vld [vmem:[#allocation10 + $0x378] sm:$0xff]
    %v712 = vld [vmem:[#allocation10 + $0x380] sm:$0xff]
    %v713 = vld [vmem:[#allocation10 + $0x388] sm:$0xff]
    %v714 = vld [vmem:[#allocation10 + $0x390] sm:$0xff]
    %v715 = vld [vmem:[#allocation10 + $0x398] sm:$0xff]
    %v716 = vld [vmem:[#allocation10 + $0x3a0] sm:$0xff]
    %v717 = vld [vmem:[#allocation10 + $0x3a8] sm:$0xff]
    %v718 = vld [vmem:[#allocation10 + $0x3b0] sm:$0xff]
    %v719 = vld [vmem:[#allocation10 + $0x3b8] sm:$0xff]
    %v720 = vld [vmem:[#allocation10 + $0x3c0] sm:$0xff]
    %v721 = vld [vmem:[#allocation10 + $0x3c8] sm:$0xff]
    %v722 = vld [vmem:[#allocation10 + $0x3d0] sm:$0xff]
    %v723 = vld [vmem:[#allocation10 + $0x3d8] sm:$0xff]
    %v724 = vld [vmem:[#allocation10 + $0x3e0] sm:$0xff]
    %v725 = vld [vmem:[#allocation10 + $0x3e8] sm:$0xff]
    %v726 = vld [vmem:[#allocation10 + $0x3f0] sm:$0xff]
    %v727 = vld [vmem:[#allocation10 + $0x3f8] sm:$0xff]
    %v728 = vld [vmem:[%s5] sm:$0xf]
    %v730 = vperm.slane %v728, 0
    %v731 = vperm.slane %v728, 1
    %v732 = vperm.slane %v728, 2
    %v733 = vperm.slane %v728, 3
    %v866 = vunpack.c.l.b16 %v600
    %v867 = vunpack.c.h.b16 %v600
    %v868 = vunpack.c.l.b16 %v601
    %v869 = vunpack.c.h.b16 %v601
    %v870 = vunpack.c.l.b16 %v602
    %v871 = vunpack.c.h.b16 %v602
    %v872 = vunpack.c.l.b16 %v603
    %v873 = vunpack.c.h.b16 %v603
    %v874 = vunpack.c.l.b16 %v604
    %v875 = vunpack.c.h.b16 %v604
    %v876 = vunpack.c.l.b16 %v605
    %v877 = vunpack.c.h.b16 %v605
    %v878 = vunpack.c.l.b16 %v606
    %v879 = vunpack.c.h.b16 %v606
    %v880 = vunpack.c.l.b16 %v607
    %v881 = vunpack.c.h.b16 %v607
    %v882 = vunpack.c.l.b16 %v608
    %v883 = vunpack.c.h.b16 %v608
    %v884 = vunpack.c.l.b16 %v609
    %v885 = vunpack.c.h.b16 %v609
    %v886 = vunpack.c.l.b16 %v610
    %v887 = vunpack.c.h.b16 %v610
    %v888 = vunpack.c.l.b16 %v611
    %v889 = vunpack.c.h.b16 %v611
    %v890 = vunpack.c.l.b16 %v612
    %v891 = vunpack.c.h.b16 %v612
    %v892 = vunpack.c.l.b16 %v613
    %v893 = vunpack.c.h.b16 %v613
    %v894 = vunpack.c.l.b16 %v614
    %v895 = vunpack.c.h.b16 %v614
    %v896 = vunpack.c.l.b16 %v615
    %v897 = vunpack.c.h.b16 %v615
    %v898 = vunpack.c.l.b16 %v616
    %v899 = vunpack.c.h.b16 %v616
    %v900 = vunpack.c.l.b16 %v617
    %v901 = vunpack.c.h.b16 %v617
    %v902 = vunpack.c.l.b16 %v618
    %v903 = vunpack.c.h.b16 %v618
    %v904 = vunpack.c.l.b16 %v619
    %v905 = vunpack.c.h.b16 %v619
    %v906 = vunpack.c.l.b16 %v620
    %v907 = vunpack.c.h.b16 %v620
    %v908 = vunpack.c.l.b16 %v621
    %v909 = vunpack.c.h.b16 %v621
    %v910 = vunpack.c.l.b16 %v622
    %v911 = vunpack.c.h.b16 %v622
    %v912 = vunpack.c.l.b16 %v623
    %v913 = vunpack.c.h.b16 %v623
    %v914 = vunpack.c.l.b16 %v624
    %v915 = vunpack.c.h.b16 %v624
    %v916 = vunpack.c.l.b16 %v625
    %v917 = vunpack.c.h.b16 %v625
    %v918 = vunpack.c.l.b16 %v626
    %v919 = vunpack.c.h.b16 %v626
    %v920 = vunpack.c.l.b16 %v627
    %v921 = vunpack.c.h.b16 %v627
    %v922 = vunpack.c.l.b16 %v628
    %v923 = vunpack.c.h.b16 %v628
    %v924 = vunpack.c.l.b16 %v629
    %v925 = vunpack.c.h.b16 %v629
    %v926 = vunpack.c.l.b16 %v630
    %v927 = vunpack.c.h.b16 %v630
    %v928 = vunpack.c.l.b16 %v631
    %v929 = vunpack.c.h.b16 %v631
    %v930 = vunpack.c.l.b16 %v632
    %v931 = vunpack.c.h.b16 %v632
    %v932 = vunpack.c.l.b16 %v633
    %v933 = vunpack.c.h.b16 %v633
    %v934 = vunpack.c.l.b16 %v634
    %v935 = vunpack.c.h.b16 %v634
    %v936 = vunpack.c.l.b16 %v635
    %v937 = vunpack.c.h.b16 %v635
    %v938 = vunpack.c.l.b16 %v636
    %v939 = vunpack.c.h.b16 %v636
    %v940 = vunpack.c.l.b16 %v637
    %v941 = vunpack.c.h.b16 %v637
    %v942 = vunpack.c.l.b16 %v638
    %v943 = vunpack.c.h.b16 %v638
    %v944 = vunpack.c.l.b16 %v639
    %v945 = vunpack.c.h.b16 %v639
    %v946 = vunpack.c.l.b16 %v640
    %v947 = vunpack.c.h.b16 %v640
    %v948 = vunpack.c.l.b16 %v641
    %v949 = vunpack.c.h.b16 %v641
    %v950 = vunpack.c.l.b16 %v642
    %v951 = vunpack.c.h.b16 %v642
    %v952 = vunpack.c.l.b16 %v643
    %v953 = vunpack.c.h.b16 %v643
    %v954 = vunpack.c.l.b16 %v644
    %v955 = vunpack.c.h.b16 %v644
    %v956 = vunpack.c.l.b16 %v645
    %v957 = vunpack.c.h.b16 %v645
    %v958 = vunpack.c.l.b16 %v646
    %v959 = vunpack.c.h.b16 %v646
    %v960 = vunpack.c.l.b16 %v647
    %v961 = vunpack.c.h.b16 %v647
    %v962 = vunpack.c.l.b16 %v648
    %v963 = vunpack.c.h.b16 %v648
    %v964 = vunpack.c.l.b16 %v649
    %v965 = vunpack.c.h.b16 %v649
    %v966 = vunpack.c.l.b16 %v650
    %v967 = vunpack.c.h.b16 %v650
    %v968 = vunpack.c.l.b16 %v651
    %v969 = vunpack.c.h.b16 %v651
    %v970 = vunpack.c.l.b16 %v652
    %v971 = vunpack.c.h.b16 %v652
    %v972 = vunpack.c.l.b16 %v653
    %v973 = vunpack.c.h.b16 %v653
    %v974 = vunpack.c.l.b16 %v654
    %v975 = vunpack.c.h.b16 %v654
    %v976 = vunpack.c.l.b16 %v655
    %v977 = vunpack.c.h.b16 %v655
    %v978 = vunpack.c.l.b16 %v656
    %v979 = vunpack.c.h.b16 %v656
    %v980 = vunpack.c.l.b16 %v657
    %v981 = vunpack.c.h.b16 %v657
    %v982 = vunpack.c.l.b16 %v658
    %v983 = vunpack.c.h.b16 %v658
    %v984 = vunpack.c.l.b16 %v659
    %v985 = vunpack.c.h.b16 %v659
    %v986 = vunpack.c.l.b16 %v660
    %v987 = vunpack.c.h.b16 %v660
    %v988 = vunpack.c.l.b16 %v661
    %v989 = vunpack.c.h.b16 %v661
    %v990 = vunpack.c.l.b16 %v662
    %v991 = vunpack.c.h.b16 %v662
    %v992 = vunpack.c.l.b16 %v663
    %v993 = vunpack.c.h.b16 %v663
    %v994 = vunpack.c.l.b16 %v664
    %v995 = vunpack.c.h.b16 %v664
    %v996 = vunpack.c.l.b16 %v665
    %v997 = vunpack.c.h.b16 %v665
    %v998 = vunpack.c.l.b16 %v666
    %v999 = vunpack.c.h.b16 %v666
    %v1000 = vunpack.c.l.b16 %v667
    %v1001 = vunpack.c.h.b16 %v667
    %v1002 = vunpack.c.l.b16 %v668
    %v1003 = vunpack.c.h.b16 %v668
    %v1004 = vunpack.c.l.b16 %v669
    %v1005 = vunpack.c.h.b16 %v669
    %v1006 = vunpack.c.l.b16 %v670
    %v1007 = vunpack.c.h.b16 %v670
    %v1008 = vunpack.c.l.b16 %v671
    %v1009 = vunpack.c.h.b16 %v671
    %v1010 = vunpack.c.l.b16 %v672
    %v1011 = vunpack.c.h.b16 %v672
    %v1012 = vunpack.c.l.b16 %v673
    %v1013 = vunpack.c.h.b16 %v673
    %v1014 = vunpack.c.l.b16 %v674
    %v1015 = vunpack.c.h.b16 %v674
    %v1016 = vunpack.c.l.b16 %v675
    %v1017 = vunpack.c.h.b16 %v675
    %v1018 = vunpack.c.l.b16 %v676
    %v1019 = vunpack.c.h.b16 %v676
    %v1020 = vunpack.c.l.b16 %v677
    %v1021 = vunpack.c.h.b16 %v677
    %v1022 = vunpack.c.l.b16 %v678
    %v1023 = vunpack.c.h.b16 %v678
    %v1024 = vunpack.c.l.b16 %v679
    %v1025 = vunpack.c.h.b16 %v679
    %v1026 = vunpack.c.l.b16 %v680
    %v1027 = vunpack.c.h.b16 %v680
    %v1028 = vunpack.c.l.b16 %v681
    %v1029 = vunpack.c.h.b16 %v681
    %v1030 = vunpack.c.l.b16 %v682
    %v1031 = vunpack.c.h.b16 %v682
    %v1032 = vunpack.c.l.b16 %v683
    %v1033 = vunpack.c.h.b16 %v683
    %v1034 = vunpack.c.l.b16 %v684
    %v1035 = vunpack.c.h.b16 %v684
    %v1036 = vunpack.c.l.b16 %v685
    %v1037 = vunpack.c.h.b16 %v685
    %v1038 = vunpack.c.l.b16 %v686
    %v1039 = vunpack.c.h.b16 %v686
    %v1040 = vunpack.c.l.b16 %v687
    %v1041 = vunpack.c.h.b16 %v687
    %v1042 = vunpack.c.l.b16 %v688
    %v1043 = vunpack.c.h.b16 %v688
    %v1044 = vunpack.c.l.b16 %v689
    %v1045 = vunpack.c.h.b16 %v689
    %v1046 = vunpack.c.l.b16 %v690
    %v1047 = vunpack.c.h.b16 %v690
    %v1048 = vunpack.c.l.b16 %v691
    %v1049 = vunpack.c.h.b16 %v691
    %v1050 = vunpack.c.l.b16 %v692
    %v1051 = vunpack.c.h.b16 %v692
    %v1052 = vunpack.c.l.b16 %v693
    %v1053 = vunpack.c.h.b16 %v693
    %v1054 = vunpack.c.l.b16 %v694
    %v1055 = vunpack.c.h.b16 %v694
    %v1056 = vunpack.c.l.b16 %v695
    %v1057 = vunpack.c.h.b16 %v695
    %v1058 = vunpack.c.l.b16 %v696
    %v1059 = vunpack.c.h.b16 %v696
    %v1060 = vunpack.c.l.b16 %v697
    %v1061 = vunpack.c.h.b16 %v697
    %v1062 = vunpack.c.l.b16 %v698
    %v1063 = vunpack.c.h.b16 %v698
    %v1064 = vunpack.c.l.b16 %v699
    %v1065 = vunpack.c.h.b16 %v699
    %v1066 = vunpack.c.l.b16 %v700
    %v1067 = vunpack.c.h.b16 %v700
    %v1068 = vunpack.c.l.b16 %v701
    %v1069 = vunpack.c.h.b16 %v701
    %v1070 = vunpack.c.l.b16 %v702
    %v1071 = vunpack.c.h.b16 %v702
    %v1072 = vunpack.c.l.b16 %v703
    %v1073 = vunpack.c.h.b16 %v703
    %v1074 = vunpack.c.l.b16 %v704
    %v1075 = vunpack.c.h.b16 %v704
    %v1076 = vunpack.c.l.b16 %v705
    %v1077 = vunpack.c.h.b16 %v705
    %v1078 = vunpack.c.l.b16 %v706
    %v1079 = vunpack.c.h.b16 %v706
    %v1080 = vunpack.c.l.b16 %v707
    %v1081 = vunpack.c.h.b16 %v707
    %v1082 = vunpack.c.l.b16 %v708
    %v1083 = vunpack.c.h.b16 %v708
    %v1084 = vunpack.c.l.b16 %v709
    %v1085 = vunpack.c.h.b16 %v709
    %v1086 = vunpack.c.l.b16 %v710
    %v1087 = vunpack.c.h.b16 %v710
    %v1088 = vunpack.c.l.b16 %v711
    %v1089 = vunpack.c.h.b16 %v711
    %v1090 = vunpack.c.l.b16 %v712
    %v1091 = vunpack.c.h.b16 %v712
    %v1092 = vunpack.c.l.b16 %v713
    %v1093 = vunpack.c.h.b16 %v713
    %v1094 = vunpack.c.l.b16 %v714
    %v1095 = vunpack.c.h.b16 %v714
    %v1096 = vunpack.c.l.b16 %v715
    %v1097 = vunpack.c.h.b16 %v715
    %v1098 = vunpack.c.l.b16 %v716
    %v1099 = vunpack.c.h.b16 %v716
    %v1100 = vunpack.c.l.b16 %v717
    %v1101 = vunpack.c.h.b16 %v717
    %v1102 = vunpack.c.l.b16 %v718
    %v1103 = vunpack.c.h.b16 %v718
    %v1104 = vunpack.c.l.b16 %v719
    %v1105 = vunpack.c.h.b16 %v719
    %v1106 = vunpack.c.l.b16 %v720
    %v1107 = vunpack.c.h.b16 %v720
    %v1108 = vunpack.c.l.b16 %v721
    %v1109 = vunpack.c.h.b16 %v721
    %v1110 = vunpack.c.l.b16 %v722
    %v1111 = vunpack.c.h.b16 %v722
    %v1112 = vunpack.c.l.b16 %v723
    %v1113 = vunpack.c.h.b16 %v723
    %v1114 = vunpack.c.l.b16 %v724
    %v1115 = vunpack.c.h.b16 %v724
    %v1116 = vunpack.c.l.b16 %v725
    %v1117 = vunpack.c.h.b16 %v725
    %v1118 = vunpack.c.l.b16 %v726
    %v1119 = vunpack.c.h.b16 %v726
    %v1120 = vunpack.c.l.b16 %v727
    %v1121 = vunpack.c.h.b16 %v727
    %v1122 = vpack.c.b16 %v870, %v866
    %v1123 = vpack.c.b16 %v871, %v867
    %v1124 = vpack.c.b16 %v872, %v868
    %v1125 = vpack.c.b16 %v873, %v869
    %v1126 = vpack.c.b16 %v878, %v874
    %v1127 = vpack.c.b16 %v879, %v875
    %v1128 = vpack.c.b16 %v880, %v876
    %v1129 = vpack.c.b16 %v881, %v877
    %v1130 = vpack.c.b16 %v886, %v882
    %v1131 = vpack.c.b16 %v887, %v883
    %v1132 = vpack.c.b16 %v888, %v884
    %v1133 = vpack.c.b16 %v889, %v885
    %v1134 = vpack.c.b16 %v894, %v890
    %v1135 = vpack.c.b16 %v895, %v891
    %v1136 = vpack.c.b16 %v896, %v892
    %v1137 = vpack.c.b16 %v897, %v893
    %v1138 = vpack.c.b16 %v902, %v898
    %v1139 = vpack.c.b16 %v903, %v899
    %v1140 = vpack.c.b16 %v904, %v900
    %v1141 = vpack.c.b16 %v905, %v901
    %v1142 = vpack.c.b16 %v910, %v906
    %v1143 = vpack.c.b16 %v911, %v907
    %v1144 = vpack.c.b16 %v912, %v908
    %v1145 = vpack.c.b16 %v913, %v909
    %v1146 = vpack.c.b16 %v918, %v914
    %v1147 = vpack.c.b16 %v919, %v915
    %v1148 = vpack.c.b16 %v920, %v916
    %v1149 = vpack.c.b16 %v921, %v917
    %v1150 = vpack.c.b16 %v926, %v922
    %v1151 = vpack.c.b16 %v927, %v923
    %v1152 = vpack.c.b16 %v928, %v924
    %v1153 = vpack.c.b16 %v929, %v925
    %v1154 = vpack.c.b16 %v934, %v930
    %v1155 = vpack.c.b16 %v935, %v931
    %v1156 = vpack.c.b16 %v936, %v932
    %v1157 = vpack.c.b16 %v937, %v933
    %v1158 = vpack.c.b16 %v942, %v938
    %v1159 = vpack.c.b16 %v943, %v939
    %v1160 = vpack.c.b16 %v944, %v940
    %v1161 = vpack.c.b16 %v945, %v941
    %v1162 = vpack.c.b16 %v950, %v946
    %v1163 = vpack.c.b16 %v951, %v947
    %v1164 = vpack.c.b16 %v952, %v948
    %v1165 = vpack.c.b16 %v953, %v949
    %v1166 = vpack.c.b16 %v958, %v954
    %v1167 = vpack.c.b16 %v959, %v955
    %v1168 = vpack.c.b16 %v960, %v956
    %v1169 = vpack.c.b16 %v961, %v957
    %v1170 = vpack.c.b16 %v966, %v962
    %v1171 = vpack.c.b16 %v967, %v963
    %v1172 = vpack.c.b16 %v968, %v964
    %v1173 = vpack.c.b16 %v969, %v965
    %v1174 = vpack.c.b16 %v974, %v970
    %v1175 = vpack.c.b16 %v975, %v971
    %v1176 = vpack.c.b16 %v976, %v972
    %v1177 = vpack.c.b16 %v977, %v973
    %v1178 = vpack.c.b16 %v982, %v978
    %v1179 = vpack.c.b16 %v983, %v979
    %v1180 = vpack.c.b16 %v984, %v980
    %v1181 = vpack.c.b16 %v985, %v981
    %v1182 = vpack.c.b16 %v990, %v986
    %v1183 = vpack.c.b16 %v991, %v987
    %v1184 = vpack.c.b16 %v992, %v988
    %v1185 = vpack.c.b16 %v993, %v989
    %v1186 = vpack.c.b16 %v998, %v994
    %v1187 = vpack.c.b16 %v999, %v995
    %v1188 = vpack.c.b16 %v1000, %v996
    %v1189 = vpack.c.b16 %v1001, %v997
    %v1190 = vpack.c.b16 %v1006, %v1002
    %v1191 = vpack.c.b16 %v1007, %v1003
    %v1192 = vpack.c.b16 %v1008, %v1004
    %v1193 = vpack.c.b16 %v1009, %v1005
    %v1194 = vpack.c.b16 %v1014, %v1010
    %v1195 = vpack.c.b16 %v1015, %v1011
    %v1196 = vpack.c.b16 %v1016, %v1012
    %v1197 = vpack.c.b16 %v1017, %v1013
    %v1198 = vpack.c.b16 %v1022, %v1018
    %v1199 = vpack.c.b16 %v1023, %v1019
    %v1200 = vpack.c.b16 %v1024, %v1020
    %v1201 = vpack.c.b16 %v1025, %v1021
    %v1202 = vpack.c.b16 %v1030, %v1026
    %v1203 = vpack.c.b16 %v1031, %v1027
    %v1204 = vpack.c.b16 %v1032, %v1028
    %v1205 = vpack.c.b16 %v1033, %v1029
    %v1206 = vpack.c.b16 %v1038, %v1034
    %v1207 = vpack.c.b16 %v1039, %v1035
    %v1208 = vpack.c.b16 %v1040, %v1036
    %v1209 = vpack.c.b16 %v1041, %v1037
    %v1210 = vpack.c.b16 %v1046, %v1042
    %v1211 = vpack.c.b16 %v1047, %v1043
    %v1212 = vpack.c.b16 %v1048, %v1044
    %v1213 = vpack.c.b16 %v1049, %v1045
    %v1214 = vpack.c.b16 %v1054, %v1050
    %v1215 = vpack.c.b16 %v1055, %v1051
    %v1216 = vpack.c.b16 %v1056, %v1052
    %v1217 = vpack.c.b16 %v1057, %v1053
    %v1218 = vpack.c.b16 %v1062, %v1058
    %v1219 = vpack.c.b16 %v1063, %v1059
    %v1220 = vpack.c.b16 %v1064, %v1060
    %v1221 = vpack.c.b16 %v1065, %v1061
    %v1222 = vpack.c.b16 %v1070, %v1066
    %v1223 = vpack.c.b16 %v1071, %v1067
    %v1224 = vpack.c.b16 %v1072, %v1068
    %v1225 = vpack.c.b16 %v1073, %v1069
    %v1226 = vpack.c.b16 %v1078, %v1074
    %v1227 = vpack.c.b16 %v1079, %v1075
    %v1228 = vpack.c.b16 %v1080, %v1076
    %v1229 = vpack.c.b16 %v1081, %v1077
    %v1230 = vpack.c.b16 %v1086, %v1082
    %v1231 = vpack.c.b16 %v1087, %v1083
    %v1232 = vpack.c.b16 %v1088, %v1084
    %v1233 = vpack.c.b16 %v1089, %v1085
    %v1234 = vpack.c.b16 %v1094, %v1090
    %v1235 = vpack.c.b16 %v1095, %v1091
    %v1236 = vpack.c.b16 %v1096, %v1092
    %v1237 = vpack.c.b16 %v1097, %v1093
    %v1238 = vpack.c.b16 %v1102, %v1098
    %v1239 = vpack.c.b16 %v1103, %v1099
    %v1240 = vpack.c.b16 %v1104, %v1100
    %v1241 = vpack.c.b16 %v1105, %v1101
    %v1242 = vpack.c.b16 %v1110, %v1106
    %v1243 = vpack.c.b16 %v1111, %v1107
    %v1244 = vpack.c.b16 %v1112, %v1108
    %v1245 = vpack.c.b16 %v1113, %v1109
    %v1246 = vpack.c.b16 %v1118, %v1114
    %v1247 = vpack.c.b16 %v1119, %v1115
    %v1248 = vpack.c.b16 %v1120, %v1116
    %v1249 = vpack.c.b16 %v1121, %v1117
    %1378 = vmatpush.bf16.msra.mxu0 %v1150
    %1379 = vmatpush.bf16.msra.mxu0 %v1146
    %1380 = vmatpush.bf16.msra.mxu0 %v1142
    %1381 = vmatpush.bf16.msra.mxu0 %v1138
    %1382 = vmatpush.bf16.msra.mxu0 %v1134
    %1383 = vmatpush.bf16.msra.mxu0 %v1130
    %1384 = vmatpush.bf16.msra.mxu0 %v1126
    %1385 = vmatpush.bf16.msra.mxu0 %v1122
    %1386 = vmatmul.bf16.gmra.mxu0 %v596
    %v1387 = vpop.f32.mrf.mxu0
    %v1388 = vadd.f32 %v730, %v1387
    %v1389 = vpop.f32.mrf.mxu0
    %1390 = vdwg.mxu0
    %1391 = vmatpush.bf16.msra.mxu0 %v1182
    %1392 = vmatpush.bf16.msra.mxu0 %v1178
    %1393 = vmatpush.bf16.msra.mxu0 %v1174
    %1394 = vmatpush.bf16.msra.mxu0 %v1170
    %1395 = vmatpush.bf16.msra.mxu0 %v1166
    %1396 = vmatpush.bf16.msra.mxu0 %v1162
    %1397 = vmatpush.bf16.msra.mxu0 %v1158
    %1398 = vmatpush.bf16.msra.mxu0 %v1154
    %1399 = vmatmul.bf16.gmra.mxu0 %v597
    %v1400 = vpop.f32.mrf.mxu0
    %v1401 = vadd.f32 %v1388, %v1400
    %v1402 = vpop.f32.mrf.mxu0
    %1403 = vdwg.mxu0
    %1404 = vmatpush.bf16.msra.mxu0 %v1214
    %1405 = vmatpush.bf16.msra.mxu0 %v1210
    %1406 = vmatpush.bf16.msra.mxu0 %v1206
    %1407 = vmatpush.bf16.msra.mxu0 %v1202
    %1408 = vmatpush.bf16.msra.mxu0 %v1198
    %1409 = vmatpush.bf16.msra.mxu0 %v1194
    %1410 = vmatpush.bf16.msra.mxu0 %v1190
    %1411 = vmatpush.bf16.msra.mxu0 %v1186
    %1412 = vmatmul.bf16.gmra.mxu0 %v598
    %v1413 = vpop.f32.mrf.mxu0
    %v1414 = vadd.f32 %v1401, %v1413
    %v1415 = vpop.f32.mrf.mxu0
    %1416 = vdwg.mxu0
    %1417 = vmatpush.bf16.msra.mxu0 %v1246
    %1418 = vmatpush.bf16.msra.mxu0 %v1242
    %1419 = vmatpush.bf16.msra.mxu0 %v1238
    %1420 = vmatpush.bf16.msra.mxu0 %v1234
    %1421 = vmatpush.bf16.msra.mxu0 %v1230
    %1422 = vmatpush.bf16.msra.mxu0 %v1226
    %1423 = vmatpush.bf16.msra.mxu0 %v1222
    %1424 = vmatpush.bf16.msra.mxu0 %v1218
    %1425 = vmatmul.bf16.gmra.mxu0 %v599
    %v1426 = vpop.f32.mrf.mxu0
    %v1427 = vadd.f32 %v1414, %v1426
    %v1428 = vpop.f32.mrf.mxu0
    %1429 = vdwg.mxu0
    %1430 = vmatpush.bf16.msra.mxu0 %v1151
    %1431 = vmatpush.bf16.msra.mxu0 %v1147
    %1432 = vmatpush.bf16.msra.mxu0 %v1143
    %1433 = vmatpush.bf16.msra.mxu0 %v1139
    %1434 = vmatpush.bf16.msra.mxu0 %v1135
    %1435 = vmatpush.bf16.msra.mxu0 %v1131
    %1436 = vmatpush.bf16.msra.mxu0 %v1127
    %1437 = vmatpush.bf16.msra.mxu0 %v1123
    %1438 = vmatmul.bf16.gmra.mxu0 %v596
    %v1439 = vpop.f32.mrf.mxu0
    %v1440 = vadd.f32 %v731, %v1439
    %v1441 = vpop.f32.mrf.mxu0
    %1442 = vdwg.mxu0
    %1443 = vmatpush.bf16.msra.mxu0 %v1183
    %1444 = vmatpush.bf16.msra.mxu0 %v1179
    %1445 = vmatpush.bf16.msra.mxu0 %v1175
    %1446 = vmatpush.bf16.msra.mxu0 %v1171
    %1447 = vmatpush.bf16.msra.mxu0 %v1167
    %1448 = vmatpush.bf16.msra.mxu0 %v1163
    %1449 = vmatpush.bf16.msra.mxu0 %v1159
    %1450 = vmatpush.bf16.msra.mxu0 %v1155
    %1451 = vmatmul.bf16.gmra.mxu0 %v597
    %v1452 = vpop.f32.mrf.mxu0
    %v1453 = vadd.f32 %v1440, %v1452
    %v1454 = vpop.f32.mrf.mxu0
    %1455 = vdwg.mxu0
    %1456 = vmatpush.bf16.msra.mxu0 %v1215
    %1457 = vmatpush.bf16.msra.mxu0 %v1211
    %1458 = vmatpush.bf16.msra.mxu0 %v1207
    %1459 = vmatpush.bf16.msra.mxu0 %v1203
    %1460 = vmatpush.bf16.msra.mxu0 %v1199
    %1461 = vmatpush.bf16.msra.mxu0 %v1195
    %1462 = vmatpush.bf16.msra.mxu0 %v1191
    %1463 = vmatpush.bf16.msra.mxu0 %v1187
    %1464 = vmatmul.bf16.gmra.mxu0 %v598
    %v1465 = vpop.f32.mrf.mxu0
    %v1466 = vadd.f32 %v1453, %v1465
    %v1467 = vpop.f32.mrf.mxu0
    %1468 = vdwg.mxu0
    %1469 = vmatpush.bf16.msra.mxu0 %v1247
    %1470 = vmatpush.bf16.msra.mxu0 %v1243
    %1471 = vmatpush.bf16.msra.mxu0 %v1239
    %1472 = vmatpush.bf16.msra.mxu0 %v1235
    %1473 = vmatpush.bf16.msra.mxu0 %v1231
    %1474 = vmatpush.bf16.msra.mxu0 %v1227
    %1475 = vmatpush.bf16.msra.mxu0 %v1223
    %1476 = vmatpush.bf16.msra.mxu0 %v1219
    %1477 = vmatmul.bf16.gmra.mxu0 %v599
    %v1478 = vpop.f32.mrf.mxu0
    %v1479 = vadd.f32 %v1466, %v1478
    %v1480 = vpop.f32.mrf.mxu0
    %1481 = vdwg.mxu0
    %1482 = vmatpush.bf16.msra.mxu0 %v1152
    %1483 = vmatpush.bf16.msra.mxu0 %v1148
    %1484 = vmatpush.bf16.msra.mxu0 %v1144
    %1485 = vmatpush.bf16.msra.mxu0 %v1140
    %1486 = vmatpush.bf16.msra.mxu0 %v1136
    %1487 = vmatpush.bf16.msra.mxu0 %v1132
    %1488 = vmatpush.bf16.msra.mxu0 %v1128
    %1489 = vmatpush.bf16.msra.mxu0 %v1124
    %1490 = vmatmul.bf16.gmra.mxu0 %v596
    %v1491 = vpop.f32.mrf.mxu0
    %v1492 = vadd.f32 %v732, %v1491
    %v1493 = vpop.f32.mrf.mxu0
    %1494 = vdwg.mxu0
    %1495 = vmatpush.bf16.msra.mxu0 %v1184
    %1496 = vmatpush.bf16.msra.mxu0 %v1180
    %1497 = vmatpush.bf16.msra.mxu0 %v1176
    %1498 = vmatpush.bf16.msra.mxu0 %v1172
    %1499 = vmatpush.bf16.msra.mxu0 %v1168
    %1500 = vmatpush.bf16.msra.mxu0 %v1164
    %1501 = vmatpush.bf16.msra.mxu0 %v1160
    %1502 = vmatpush.bf16.msra.mxu0 %v1156
    %1503 = vmatmul.bf16.gmra.mxu0 %v597
    %v1504 = vpop.f32.mrf.mxu0
    %v1505 = vadd.f32 %v1492, %v1504
    %v1506 = vpop.f32.mrf.mxu0
    %1507 = vdwg.mxu0
    %1508 = vmatpush.bf16.msra.mxu0 %v1216
    %1509 = vmatpush.bf16.msra.mxu0 %v1212
    %1510 = vmatpush.bf16.msra.mxu0 %v1208
    %1511 = vmatpush.bf16.msra.mxu0 %v1204
    %1512 = vmatpush.bf16.msra.mxu0 %v1200
    %1513 = vmatpush.bf16.msra.mxu0 %v1196
    %1514 = vmatpush.bf16.msra.mxu0 %v1192
    %1515 = vmatpush.bf16.msra.mxu0 %v1188
    %1516 = vmatmul.bf16.gmra.mxu0 %v598
    %v1517 = vpop.f32.mrf.mxu0
    %v1518 = vadd.f32 %v1505, %v1517
    %v1519 = vpop.f32.mrf.mxu0
    %1520 = vdwg.mxu0
    %1521 = vmatpush.bf16.msra.mxu0 %v1248
    %1522 = vmatpush.bf16.msra.mxu0 %v1244
    %1523 = vmatpush.bf16.msra.mxu0 %v1240
    %1524 = vmatpush.bf16.msra.mxu0 %v1236
    %1525 = vmatpush.bf16.msra.mxu0 %v1232
    %1526 = vmatpush.bf16.msra.mxu0 %v1228
    %1527 = vmatpush.bf16.msra.mxu0 %v1224
    %1528 = vmatpush.bf16.msra.mxu0 %v1220
    %1529 = vmatmul.bf16.gmra.mxu0 %v599
    %v1530 = vpop.f32.mrf.mxu0
    %v1531 = vadd.f32 %v1518, %v1530
    %v1532 = vpop.f32.mrf.mxu0
    %1533 = vdwg.mxu0
    %1534 = vmatpush.bf16.msra.mxu0 %v1153
    %1535 = vmatpush.bf16.msra.mxu0 %v1149
    %1536 = vmatpush.bf16.msra.mxu0 %v1145
    %1537 = vmatpush.bf16.msra.mxu0 %v1141
    %1538 = vmatpush.bf16.msra.mxu0 %v1137
    %1539 = vmatpush.bf16.msra.mxu0 %v1133
    %1540 = vmatpush.bf16.msra.mxu0 %v1129
    %1541 = vmatpush.bf16.msra.mxu0 %v1125
    %1542 = vmatmul.bf16.gmra.mxu0 %v596
    %v1543 = vpop.f32.mrf.mxu0
    %v1544 = vadd.f32 %v733, %v1543
    %v1545 = vpop.f32.mrf.mxu0
    %1546 = vdwg.mxu0
    %1547 = vmatpush.bf16.msra.mxu0 %v1185
    %1548 = vmatpush.bf16.msra.mxu0 %v1181
    %1549 = vmatpush.bf16.msra.mxu0 %v1177
    %1550 = vmatpush.bf16.msra.mxu0 %v1173
    %1551 = vmatpush.bf16.msra.mxu0 %v1169
    %1552 = vmatpush.bf16.msra.mxu0 %v1165
    %1553 = vmatpush.bf16.msra.mxu0 %v1161
    %1554 = vmatpush.bf16.msra.mxu0 %v1157
    %1555 = vmatmul.bf16.gmra.mxu0 %v597
    %v1556 = vpop.f32.mrf.mxu0
    %v1557 = vadd.f32 %v1544, %v1556
    %v1558 = vpop.f32.mrf.mxu0
    %1559 = vdwg.mxu0
    %1560 = vmatpush.bf16.msra.mxu0 %v1217
    %1561 = vmatpush.bf16.msra.mxu0 %v1213
    %1562 = vmatpush.bf16.msra.mxu0 %v1209
    %1563 = vmatpush.bf16.msra.mxu0 %v1205
    %1564 = vmatpush.bf16.msra.mxu0 %v1201
    %1565 = vmatpush.bf16.msra.mxu0 %v1197
    %1566 = vmatpush.bf16.msra.mxu0 %v1193
    %1567 = vmatpush.bf16.msra.mxu0 %v1189
    %1568 = vmatmul.bf16.gmra.mxu0 %v598
    %v1569 = vpop.f32.mrf.mxu0
    %v1570 = vadd.f32 %v1557, %v1569
    %v1571 = vpop.f32.mrf.mxu0
    %1572 = vdwg.mxu0
    %1573 = vmatpush.bf16.msra.mxu0 %v1249
    %1574 = vmatpush.bf16.msra.mxu0 %v1245
    %1575 = vmatpush.bf16.msra.mxu0 %v1241
    %1576 = vmatpush.bf16.msra.mxu0 %v1237
    %1577 = vmatpush.bf16.msra.mxu0 %v1233
    %1578 = vmatpush.bf16.msra.mxu0 %v1229
    %1579 = vmatpush.bf16.msra.mxu0 %v1225
    %1580 = vmatpush.bf16.msra.mxu0 %v1221
    %1581 = vmatmul.bf16.gmra.mxu0 %v599
    %v1582 = vpop.f32.mrf.mxu0
    %v1583 = vadd.f32 %v1570, %v1582
    %v1584 = vpop.f32.mrf.mxu0
    %1585 = vdwg.mxu0
    %1586 = vst [vmem:[#allocation11] sm:$0xff] %v1427
    %1587 = vst [vmem:[#allocation11 + $0x8] sm:$0xff] %v1479
    %1588 = vst [vmem:[#allocation11 + $0x10] sm:$0xff] %v1531
    %1589 = vst [vmem:[#allocation11 + $0x18] sm:$0xff] %v1583
    // Predicated region
    $region46: #{_cond_pallas.1} parent=1 // pred_check
      _
    $region47: #{_cond_pallas.1} parent=1 // pred_check_branch
      %1591 = sbr.rel (0) target = $region49
    $region48: #{_cond_pallas.1} parent=1 // pred_region
      %1593 = vsyncadd [#allocation4], 0
      %s1595 = sshll.u32 [#allocation11], 4
      %s1596 = int_to_ptr.vmem [resolvable:$true] %s1595
      %s1597 = sshll.u32 %s6, 4
      %s1598 = int_to_ptr.hbm [resolvable:$true] %s1597
      %1600 = dma.vmem_to_hbm [thread:$0]  %s1596, 512, %s1598, [#allocation4]
    $region49: #{_cond_pallas.1} parent=1 // pred_fallthru
      _
    // Predicated region
    $region50: #{_cond_pallas.1} parent=1 // pred_check
      _
    $region51: #{_cond_pallas.1} parent=1 // pred_check_branch
      %1602 = sbr.rel (0) target = $region53
    $region52: #{_cond_pallas.1} parent=1 // pred_region
      %1604 = dma.done [#allocation4], 512
    $region53: #{_cond_pallas.1} parent=1 // pred_fallthru
      _
    %1605 = vsyncpa [#allocation3], 1
    %1606 = vsyncpa [#allocation6], 1
    %1607 = vsyncpa [#allocation9], 1
    %1608 = vsyncpa [#allocation4], 1

</llo_original>
